<compile_context>
chip_gen: v7x
topology: tpu7x:2x2x1
jax: 0.10.0
libtpu: 0.0.40
codegen_flags: <defaults>
</compile_context>

<pallas_src>
import functools

import jax
import jax.numpy as jnp
import numpy as np
from jax import lax
from jax.experimental import pallas as pl
from jax.experimental.pallas import tpu as pltpu

BN_EPS = 1e-5
ROW_TILE = 2048          # L-tile; multiple of 128 so tiled stores stay unmasked
VMEM_LIMIT = 32 << 20    # safe on v7x (64 MiB/TC); working set here is only ~4 MiB


def _round_up(x, m):
    return ((x + m - 1) // m) * m


def _choose_l_tiling(L, B, row_tile):
    """Return (TL, L_pad, num_l_tiles).

    Ensures >=2 total parallel grid tiles (B * num_l_tiles) when feasible so
    v7x's 2 TensorCores are both used, and keeps TL a multiple of 128 whenever
    the L axis is actually tiled (lane-dense output stores, aligned loads)."""
    if L <= row_tile:
        if B >= 2 or L < 256:
            return L, L, 1                      # single full-extent block
        TL = _round_up(pl.cdiv(L, 2), 128)      # split L into >=2 aligned tiles
    else:
        TL = row_tile
    L_pad = _round_up(L, TL)
    return TL, L_pad, L_pad // TL


def _conv_stats_kernel(xc_ref, wt_ref, part_ref):
    """xc_ref: (TL, KC_pad) im2col tile, wt_ref: (Cout, KC_pad),
    part_ref: (Cout, 2) -> col0 = per-channel sum, col1 = per-channel sum_sq.
    Conv is computed in transposed orientation: acc = wt @ xc.T -> (Cout, TL).
    No conv activations are written to HBM."""
    acc = lax.dot_general(wt_ref[...], xc_ref[...],
                          (((1,), (1,)), ((), ())),
                          preferred_element_type=jnp.float32)
    part_ref[:, 0:1] = jnp.sum(acc, axis=1, keepdims=True)
    part_ref[:, 1:2] = jnp.sum(acc * acc, axis=1, keepdims=True)


def _bn_relu_kernel(xc_ref, wt_ref, scale_ref, shift_ref, o_ref):
    """Recompute the conv (KC contraction is tiny; MXU has huge slack), apply
    the folded BN scale/shift and ReLU, and write (Cout, TL) so the output is
    already in the final (B, Cout, L) layout."""
    acc = lax.dot_general(wt_ref[...], xc_ref[...],
                          (((1,), (1,)), ((), ())),
                          preferred_element_type=jnp.float32)
    o_ref[...] = jnp.maximum(acc * scale_ref[...] + shift_ref[...], 0.0)


@functools.partial(jax.jit, static_argnames=("padding",))
def conv1d_bn_relu(x_ncl, weight, bias, gamma, beta, *, padding):
    """x_ncl: (B, Cin, L); weight: (Cout, Cin, K); bias/gamma/beta: (Cout,).

    NOTE: `bias` is accepted for interface fidelity but intentionally unused —
    a per-channel conv bias cancels exactly inside training-mode BatchNorm."""
    del bias
    B, Cin, L = x_ncl.shape
    Cout, _, K = weight.shape
    KC = K * Cin
    KC_pad = _round_up(KC, 8)

    # ---- wrapper-side im2col (a separate, materialized XLA op) --------------
    x_pad = jnp.pad(x_ncl, ((0, 0), (0, 0), (padding, padding)))   # (B, Cin, L+2p)
    x_blc = jnp.transpose(x_pad, (0, 2, 1))                        # (B, L+2p, Cin)
    cols = jnp.stack([x_blc[:, t:t + L, :] for t in range(K)], axis=2)
    xc = cols.reshape(B, L, KC)                                    # (B, L, K*Cin)

    TL, L_pad, num_l_tiles = _choose_l_tiling(L, B, ROW_TILE)
    xc = jnp.pad(xc, ((0, 0), (0, L_pad - L), (0, KC_pad - KC)))   # zero rows/cols

    # weight in (Cout, K*Cin) layout matching xc's column order
    wt = jnp.transpose(weight, (0, 2, 1)).reshape(Cout, KC)
    wt = jnp.pad(wt, ((0, 0), (0, KC_pad - KC)))

    grid = (B, num_l_tiles)
    cparams = pltpu.CompilerParams(
        dimension_semantics=("parallel", "parallel"),
        vmem_limit_bytes=VMEM_LIMIT,
    )

    # ---- pass 1: per-tile partial BN statistics only ------------------------
    partials = pl.pallas_call(
        _conv_stats_kernel,
        out_shape=jax.ShapeDtypeStruct((B * num_l_tiles, Cout, 2), jnp.float32),
        grid=grid,
        in_specs=[
            pl.BlockSpec((None, TL, KC_pad), lambda b, l: (b, l, 0)),
            pl.BlockSpec((Cout, KC_pad), lambda b, l: (0, 0)),
        ],
        out_specs=pl.BlockSpec((None, Cout, 2),
                               lambda b, l: (b * num_l_tiles + l, 0, 0)),
        compiler_params=cparams,
    )(xc, wt)

    # ---- tiny JAX glue: combine partials, fold BN affine into scale/shift ---
    total_sum = jnp.sum(partials[..., 0], axis=0)                  # (Cout,)
    total_sq = jnp.sum(partials[..., 1], axis=0)                   # (Cout,)
    n = jnp.float32(B * L)                                         # padded rows are zero
    mean = total_sum / n
    var = jnp.maximum(total_sq / n - mean * mean, 0.0)
    scale = gamma * lax.rsqrt(var + BN_EPS)
    shift = beta - mean * scale
    scale_col = scale.reshape(Cout, 1)
    shift_col = shift.reshape(Cout, 1)

    # ---- pass 2: recompute conv, apply scale/shift + ReLU, emit (B, Cout, L) -
    y = pl.pallas_call(
        _bn_relu_kernel,
        out_shape=jax.ShapeDtypeStruct((B, Cout, L_pad), jnp.float32),
        grid=grid,
        in_specs=[
            pl.BlockSpec((None, TL, KC_pad), lambda b, l: (b, l, 0)),
            pl.BlockSpec((Cout, KC_pad), lambda b, l: (0, 0)),
            pl.BlockSpec((Cout, 1), lambda b, l: (0, 0)),
            pl.BlockSpec((Cout, 1), lambda b, l: (0, 0)),
        ],
        out_specs=pl.BlockSpec((None, Cout, TL), lambda b, l: (b, 0, l)),
        compiler_params=cparams,
    )(xc, wt, scale_col, shift_col)

    return y if L_pad == L else y[:, :, :L]


def _reference(x_ncl, weight, bias, gamma, beta, padding):
    """Pure-JAX reference matching nn.Conv1d -> nn.BatchNorm1d(train) -> ReLU."""
    conv = lax.conv_general_dilated(
        x_ncl, weight, window_strides=(1,), padding=[(padding, padding)],
        dimension_numbers=("NCH", "OIH", "NCH"))
    conv = conv + bias[None, :, None]
    mean = jnp.mean(conv, axis=(0, 2), keepdims=True)
    var = jnp.mean((conv - mean) ** 2, axis=(0, 2), keepdims=True)
    y = (conv - mean) * lax.rsqrt(var + BN_EPS)
    y = y * gamma[None, :, None] + beta[None, :, None]
    return jnp.maximum(y, 0.0)


if __name__ == "__main__":
    # Conv1dReLU(in_channels=4, out_channels=8, kernel_size=3, stride=1, padding=1)
    B, Cin, Cout, L, K, PAD = 2, 4, 8, 16, 3, 1

    key = jax.random.PRNGKey(0)
    kx, kw, kb, kg, kbe = jax.random.split(key, 5)
    x = jax.random.normal(kx, (B, Cin, L), dtype=jnp.float32)
    weight = jax.random.normal(kw, (Cout, Cin, K), dtype=jnp.float32) * 0.1
    bias = jax.random.normal(kb, (Cout,), dtype=jnp.float32) * 0.1
    gamma = 1.0 + 0.1 * jax.random.normal(kg, (Cout,), dtype=jnp.float32)
    beta = 0.1 * jax.random.normal(kbe, (Cout,), dtype=jnp.float32)

    out = conv1d_bn_relu(x, weight, bias, gamma, beta, padding=PAD)
    out = jax.block_until_ready(out)

    ref = _reference(x, weight, bias, gamma, beta, PAD)
    np.testing.assert_allclose(np.asarray(out), np.asarray(ref),
                               rtol=1e-5, atol=1e-5)
    print("KERNEL_OK")
</pallas_src>

<mosaic_0001>
module attributes {stable_mosaic.version = 11 : i64} {
  func.func @_conv_stats_kernel(%arg0: i32, %arg1: i32, %arg2: memref<1x16x16xf32, #tpu.memory_space<vmem>>, %arg3: memref<8x16xf32, #tpu.memory_space<vmem>>, %arg4: memref<1x8x2xf32, #tpu.memory_space<vmem>>) attributes {dimension_semantics = [#tpu.dimension_semantics<parallel>, #tpu.dimension_semantics<parallel>], iteration_bounds = array<i64: 2, 1>, scalar_prefetch = 0 : i64, scratch_operands = 0 : i64, tpu.core_type = #tpu.core_type<tc>, window_params = [{transform_indices = @transform_0, window_bounds = array<i64: 1, 16, 16>}, {pipeline_mode = #tpu.pipeline_mode<synchronous>, transform_indices = @transform_1, window_bounds = array<i64: 8, 16>}, {transform_indices = @transform_2, window_bounds = array<i64: 1, 8, 2>}]} {
    %c0 = arith.constant 0 : index
    %c0_0 = arith.constant 0 : index
    %0 = vector.load %arg3[%c0, %c0_0] : memref<8x16xf32, #tpu.memory_space<vmem>>, vector<8x16xf32>
    %c0_1 = arith.constant 0 : index
    %c0_2 = arith.constant 0 : index
    %c0_3 = arith.constant 0 : index
    %1 = vector.load %arg2[%c0_1, %c0_2, %c0_3] : memref<1x16x16xf32, #tpu.memory_space<vmem>>, vector<1x16x16xf32>
    %2 = vector.shape_cast %1 : vector<1x16x16xf32> to vector<16x16xf32>
    %cst = arith.constant dense<0.000000e+00> : vector<8x16xf32>
    %3 = tpu.matmul %0, %2, %cst {dimension_numbers = #tpu.dot_dimension_numbers<[1], [1], [0], [0], [0, 0, 1, 0], [], []>} : vector<8x16xf32>, vector<16x16xf32>, vector<8x16xf32> -> vector<8x16xf32>
    %cst_4 = arith.constant dense<0.000000e+00> : vector<8xf32>
    %4 = vector.multi_reduction <add>, %3, %cst_4 [1] : vector<8x16xf32> to vector<8xf32>
    %5 = vector.shape_cast %4 : vector<8xf32> to vector<8x1xf32>
    %c0_5 = arith.constant 0 : index
    %c0_6 = arith.constant 0 : index
    %c0_7 = arith.constant 0 : index
    %6 = vector.load %arg4[%c0_5, %c0_6, %c0_7] : memref<1x8x2xf32, #tpu.memory_space<vmem>>, vector<1x8x1xf32>
    %7 = vector.shape_cast %6 : vector<1x8x1xf32> to vector<8x1xf32>
    %8 = vector.shape_cast %5 : vector<8x1xf32> to vector<1x8x1xf32>
    tpu.vector_store %arg4[%c0_5, %c0_6, %c0_7], %8 {strides = array<i32>} : memref<1x8x2xf32, #tpu.memory_space<vmem>>, vector<1x8x1xf32>,
    %9 = arith.mulf %3, %3 : vector<8x16xf32>
    %cst_8 = arith.constant dense<0.000000e+00> : vector<8xf32>
    %10 = vector.multi_reduction <add>, %9, %cst_8 [1] : vector<8x16xf32> to vector<8xf32>
    %11 = vector.shape_cast %10 : vector<8xf32> to vector<8x1xf32>
    %c0_9 = arith.constant 0 : index
    %c0_10 = arith.constant 0 : index
    %c1 = arith.constant 1 : index
    %12 = vector.load %arg4[%c0_9, %c0_10, %c1] : memref<1x8x2xf32, #tpu.memory_space<vmem>>, vector<1x8x1xf32>
    %13 = vector.shape_cast %12 : vector<1x8x1xf32> to vector<8x1xf32>
    %14 = vector.shape_cast %11 : vector<8x1xf32> to vector<1x8x1xf32>
    tpu.vector_store %arg4[%c0_9, %c0_10, %c1], %14 {strides = array<i32>} : memref<1x8x2xf32, #tpu.memory_space<vmem>>, vector<1x8x1xf32>,
    return
  }
  func.func @transform_0(%arg0: i32, %arg1: i32) -> (i32, i32, i32) {
    %c0_i32 = arith.constant 0 : i32
    %c0_i32_0 = arith.constant 0 : i32
    return %arg0, %arg1, %c0_i32 : i32, i32, i32
  }
  func.func @transform_1(%arg0: i32, %arg1: i32) -> (i32, i32) {
    %c0_i32 = arith.constant 0 : i32
    %c0_i32_0 = arith.constant 0 : i32
    %c0_i32_1 = arith.constant 0 : i32
    return %c0_i32, %c0_i32_0 : i32, i32
  }
  func.func @transform_2(%arg0: i32, %arg1: i32) -> (i32, i32, i32) {
    %c1_i32 = arith.constant 1 : i32
    %0 = arith.muli %arg0, %c1_i32 : i32
    %1 = arith.addi %0, %arg1 : i32
    %c0_i32 = arith.constant 0 : i32
    %c0_i32_0 = arith.constant 0 : i32
    %c0_i32_1 = arith.constant 0 : i32
    return %1, %c0_i32, %c0_i32_0 : i32, i32, i32
  }
}

module attributes {stable_mosaic.version = 11 : i64} {
  func.func @_bn_relu_kernel(%arg0: i32, %arg1: i32, %arg2: memref<1x16x16xf32, #tpu.memory_space<vmem>>, %arg3: memref<8x16xf32, #tpu.memory_space<vmem>>, %arg4: memref<8x1xf32, #tpu.memory_space<vmem>>, %arg5: memref<8x1xf32, #tpu.memory_space<vmem>>, %arg6: memref<1x8x16xf32, #tpu.memory_space<vmem>>) attributes {dimension_semantics = [#tpu.dimension_semantics<parallel>, #tpu.dimension_semantics<parallel>], iteration_bounds = array<i64: 2, 1>, scalar_prefetch = 0 : i64, scratch_operands = 0 : i64, tpu.core_type = #tpu.core_type<tc>, window_params = [{transform_indices = @transform_0, window_bounds = array<i64: 1, 16, 16>}, {pipeline_mode = #tpu.pipeline_mode<synchronous>, transform_indices = @transform_1, window_bounds = array<i64: 8, 16>}, {pipeline_mode = #tpu.pipeline_mode<synchronous>, transform_indices = @transform_2, window_bounds = array<i64: 8, 1>}, {pipeline_mode = #tpu.pipeline_mode<synchronous>, transform_indices = @transform_3, window_bounds = array<i64: 8, 1>}, {transform_indices = @transform_4, window_bounds = array<i64: 1, 8, 16>}]} {
    %c0 = arith.constant 0 : index
    %c0_0 = arith.constant 0 : index
    %0 = vector.load %arg3[%c0, %c0_0] : memref<8x16xf32, #tpu.memory_space<vmem>>, vector<8x16xf32>
    %c0_1 = arith.constant 0 : index
    %c0_2 = arith.constant 0 : index
    %c0_3 = arith.constant 0 : index
    %1 = vector.load %arg2[%c0_1, %c0_2, %c0_3] : memref<1x16x16xf32, #tpu.memory_space<vmem>>, vector<1x16x16xf32>
    %2 = vector.shape_cast %1 : vector<1x16x16xf32> to vector<16x16xf32>
    %cst = arith.constant dense<0.000000e+00> : vector<8x16xf32>
    %3 = tpu.matmul %0, %2, %cst {dimension_numbers = #tpu.dot_dimension_numbers<[1], [1], [0], [0], [0, 0, 1, 0], [], []>} : vector<8x16xf32>, vector<16x16xf32>, vector<8x16xf32> -> vector<8x16xf32>
    %c0_4 = arith.constant 0 : index
    %c0_5 = arith.constant 0 : index
    %4 = vector.load %arg4[%c0_4, %c0_5] : memref<8x1xf32, #tpu.memory_space<vmem>>, vector<8x1xf32>
    %5 = vector.broadcast %4 : vector<8x1xf32> to vector<8x16xf32>
    %6 = arith.mulf %3, %5 : vector<8x16xf32>
    %c0_6 = arith.constant 0 : index
    %c0_7 = arith.constant 0 : index
    %7 = vector.load %arg5[%c0_6, %c0_7] : memref<8x1xf32, #tpu.memory_space<vmem>>, vector<8x1xf32>
    %8 = vector.broadcast %7 : vector<8x1xf32> to vector<8x16xf32>
    %9 = arith.addf %6, %8 : vector<8x16xf32>
    %cst_8 = arith.constant 0.000000e+00 : f32
    %10 = vector.broadcast %cst_8 : f32 to vector<8x16xf32>
    %11 = arith.maximumf %9, %10 : vector<8x16xf32>
    %c0_9 = arith.constant 0 : index
    %c0_10 = arith.constant 0 : index
    %c0_11 = arith.constant 0 : index
    %12 = vector.load %arg6[%c0_9, %c0_10, %c0_11] : memref<1x8x16xf32, #tpu.memory_space<vmem>>, vector<1x8x16xf32>
    %13 = vector.shape_cast %12 : vector<1x8x16xf32> to vector<8x16xf32>
    %14 = vector.shape_cast %11 : vector<8x16xf32> to vector<1x8x16xf32>
    tpu.vector_store %arg6[%c0_9, %c0_10, %c0_11], %14 {strides = array<i32>} : memref<1x8x16xf32, #tpu.memory_space<vmem>>, vector<1x8x16xf32>,
    return
  }
  func.func @transform_0(%arg0: i32, %arg1: i32) -> (i32, i32, i32) {
    %c0_i32 = arith.constant 0 : i32
    %c0_i32_0 = arith.constant 0 : i32
    return %arg0, %arg1, %c0_i32 : i32, i32, i32
  }
  func.func @transform_1(%arg0: i32, %arg1: i32) -> (i32, i32) {
    %c0_i32 = arith.constant 0 : i32
    %c0_i32_0 = arith.constant 0 : i32
    %c0_i32_1 = arith.constant 0 : i32
    return %c0_i32, %c0_i32_0 : i32, i32
  }
  func.func @transform_2(%arg0: i32, %arg1: i32) -> (i32, i32) {
    %c0_i32 = arith.constant 0 : i32
    %c0_i32_0 = arith.constant 0 : i32
    %c0_i32_1 = arith.constant 0 : i32
    return %c0_i32, %c0_i32_0 : i32, i32
  }
  func.func @transform_3(%arg0: i32, %arg1: i32) -> (i32, i32) {
    %c0_i32 = arith.constant 0 : i32
    %c0_i32_0 = arith.constant 0 : i32
    %c0_i32_1 = arith.constant 0 : i32
    return %c0_i32, %c0_i32_0 : i32, i32
  }
  func.func @transform_4(%arg0: i32, %arg1: i32) -> (i32, i32, i32) {
    %c0_i32 = arith.constant 0 : i32
    %c0_i32_0 = arith.constant 0 : i32
    return %arg0, %c0_i32, %arg1 : i32, i32, i32
  }
}

</mosaic_0001>

<llo_original>
// kernel: conv1d_bn_relu.2
$region0: #{conv1d_bn_relu.2}
  #allocation0 [shape = 'u32[]', space=smem, size = 0x4, offset = 0x4, fixed_abs, tag = 'smem constant byte address 0x4 - core index']
  #allocation1 [shape = 'u32[144,128]{1,0:T(1,128)}', space=vmem, size = 0x12000, scoped, tag = 'internal scratch']
  %s0 = inlined_call_operand.vmem [shape: f32[2,16,16], index: 0, kind: input, shape index: {}]
  %s1 = inlined_call_operand.vmem [shape: f32[8,16], index: 1, kind: input, shape index: {}]
  %s2 = inlined_call_operand.vmem [shape: f32[2,8,2], index: 2, kind: output, shape index: {}]
  %s3 = sld [smem:[#allocation0]]
  $region41: #{conv1d_bn_relu.2} parent=0
    _
  %s5 = ssub.s32 1, %s3
  %s6 = scalar_select 0, %s5, %s3
  loop: start=0, step=1, limit=4
  $region2: #{conv1d_bn_relu.2} parent=0 // loop_pre_header
    _
  $region3: #{conv1d_bn_relu.2} parent=0 // loop_header
    %s8 = sphi 0, %s12
    %p9 = scmp.ge.s32.totalorder %s8, 4
    %s15 = sphi 0, %s27
    %s16 = sphi 0, %s23
    %s17 = sphi 0, %s15
    %s18 = sphi 0, %s16
    %s19 = sphi 0, %s17
    %s20 = sphi 0, %s18
    %s32 = sphi 0, %s34
    %s35 = sphi 0, %s32
    %s36 = sphi 0, %s35
    %s52 = sphi 0, %s36
    %s56 = sphi 0, %s56
    %s58 = sphi 0, %s56
    %s59 = sphi 0, %s58
    %s73 = sphi 0, %s59
    %s81 = sphi 0, %s83
    %s84 = sphi 0, %s81
    %s85 = sphi 0, %s84
    %s101 = sphi 0, %s85
  $region4: #{conv1d_bn_relu.2} parent=0 // loop_header_branch
    %11 = sbr.rel (%p9) target = $region8
  $region5: #{conv1d_bn_relu.2} parent=0 // loop_body
    %s13 = ssub.s32 %s8, 1
    %s14 = ssub.s32 %s8, 2
    %s21 = sadd.s32 1, %s16
    %p22 = scmp.ge.s32.totalorder %s21, 1
    %s23 = scalar_select %p22, 0, %s21
    %s24 = sadd.s32 1, %s15
    %s25 = scalar_select %p22, %s24, %s15
    %p26 = scmp.ge.s32.totalorder %s25, 2
    %s27 = scalar_select %p26, 0, %s25
    %s28 = ssub.s32 %s15, %s27
    %s29 = ssub.s32 %s16, %s23
    %s30 = sor.u32 %s28, %s29
    %p31 = scmp.eq.s32.totalorder %s30, 0
    %s33 = sadd.s32 %s32, 1
    %s34 = scalar_select %p31, %s32, %s33
    %p37 = pneg %p31
    %p38 = scmp.eq.s32.totalorder %s8, 1
    %p39 = por %p37, %p38
    %p40 = scmp.ne.s32.totalorder %s32, %s35
    %p41 = scmp.eq.s32.totalorder %s8, 0
    %p42 = por %p40, %p41
    %p43 = scmp.ne.s32.totalorder %s32, %s35
    %p44 = scmp.eq.s32.totalorder %s13, 1
    %p45 = por %p43, %p44
    %p46 = scmp.ne.s32.totalorder %s35, %s36
    %p47 = scmp.eq.s32.totalorder %s13, 0
    %p48 = por %p46, %p47
    %p49 = scmp.ne.s32.totalorder %s35, %s36
    %p50 = scmp.eq.s32.totalorder %s14, 1
    %p51 = por %p49, %p50
    %p53 = scmp.ne.s32.totalorder %s36, %s52
    %p54 = scmp.eq.s32.totalorder %s14, 0
    %p55 = por %p53, %p54
    %s57 = sadd.s32 %s56, 1
    %p60 = scmp.eq.s32.totalorder %s8, 1
    %p61 = scmp.ne.s32.totalorder %s56, %s58
    %p62 = scmp.eq.s32.totalorder %s8, 0
    %p63 = por %p61, %p62
    %p64 = scmp.ne.s32.totalorder %s56, %s58
    %p65 = scmp.eq.s32.totalorder %s13, 1
    %p66 = por %p64, %p65
    %p67 = scmp.ne.s32.totalorder %s58, %s59
    %p68 = scmp.eq.s32.totalorder %s13, 0
    %p69 = por %p67, %p68
    %p70 = scmp.ne.s32.totalorder %s58, %s59
    %p71 = scmp.eq.s32.totalorder %s14, 1
    %p72 = por %p70, %p71
    %p74 = scmp.ne.s32.totalorder %s59, %s73
    %p75 = scmp.eq.s32.totalorder %s14, 0
    %p76 = por %p74, %p75
    %s77 = sadd.s32 %s15, %s16
    %s78 = sadd.s32 %s27, %s23
    %s79 = ssub.s32 %s77, %s78
    %p80 = scmp.eq.s32.totalorder %s79, 0
    %s82 = sadd.s32 %s81, 1
    %s83 = scalar_select %p80, %s81, %s82
    %p86 = pneg %p80
    %p87 = scmp.eq.s32.totalorder %s8, 1
    %p88 = por %p86, %p87
    %p89 = scmp.ne.s32.totalorder %s81, %s84
    %p90 = scmp.eq.s32.totalorder %s8, 0
    %p91 = por %p89, %p90
    %p92 = scmp.ne.s32.totalorder %s81, %s84
    %p93 = scmp.eq.s32.totalorder %s13, 1
    %p94 = por %p92, %p93
    %p95 = scmp.ne.s32.totalorder %s84, %s85
    %p96 = scmp.eq.s32.totalorder %s13, 0
    %p97 = por %p95, %p96
    %p98 = scmp.ne.s32.totalorder %s84, %s85
    %p99 = scmp.eq.s32.totalorder %s14, 1
    %p100 = por %p98, %p99
    %p102 = scmp.ne.s32.totalorder %s85, %s101
    %p103 = scmp.eq.s32.totalorder %s14, 0
    %p104 = por %p102, %p103
    %p105 = scmp.le.s32.totalorder 1, %s8
    %p106 = scmp.lt.s32.totalorder %s8, 3
    %p107 = pnand %p105, %p106
    %p108 = pneg %p107
    // Predicated region
    $region9: #{conv1d_bn_relu.2} parent=5 // pred_check
      _
    $region10: #{conv1d_bn_relu.2} parent=5 // pred_check_branch
      %110 = sbr.rel (%p107) target = $region12
    $region11: #{conv1d_bn_relu.2} parent=5 // pred_region
      %s111 = ssub.s32 %s8, 1
      // Predicated region
      $region13: #{conv1d_bn_relu.2} parent=11 // pred_check
        %p112 = pneg %p69
      $region14: #{conv1d_bn_relu.2} parent=11 // pred_check_branch
        %114 = sbr.rel (%p112) target = $region16
      $region15: #{conv1d_bn_relu.2} parent=11 // pred_region
        _
      $region16: #{conv1d_bn_relu.2} parent=11 // pred_fallthru
        _
    $region12: #{conv1d_bn_relu.2} parent=5 // pred_fallthru
      _
    %p115 = scmp.lt.s32.totalorder %s8, 2
    // Predicated region
    $region17: #{conv1d_bn_relu.2} parent=5 // pred_check
      %p116 = pneg %p115
    $region18: #{conv1d_bn_relu.2} parent=5 // pred_check_branch
      %118 = sbr.rel (%p116) target = $region20
    $region19: #{conv1d_bn_relu.2} parent=5 // pred_region
      // Predicated region
      $region21: #{conv1d_bn_relu.2} parent=19 // pred_check
        %p119 = pneg %p42
      $region22: #{conv1d_bn_relu.2} parent=19 // pred_check_branch
        %121 = sbr.rel (%p119) target = $region24
      $region23: #{conv1d_bn_relu.2} parent=19 // pred_region
        %s122 = smul.u32 2, %s16
        %p123 = scmp.lt.s32.totalorder %s15, 1
        %s124 = scalar_select %p123, %s15, 1
        %p125 = scmp.lt.s32.totalorder %s122, 1
        %s126 = scalar_select %p125, %s122, 1
        %s127 = smul.addr %s124, 2
        %s128 = sadd.s32 %s126, %s127
        %s129 = smul.addr %s128, 8
        %s130 = scalar_lea.vmem %s0, %s129
        %s131 = smul.u32 2, %s16
      $region24: #{conv1d_bn_relu.2} parent=19 // pred_fallthru
        _
    $region20: #{conv1d_bn_relu.2} parent=5 // pred_fallthru
      _
    %p132 = scmp.le.s32.totalorder 1, %s8
    %p133 = scmp.lt.s32.totalorder %s8, 3
    %p134 = pnand %p132, %p133
    %p135 = pneg %p134
    // Predicated region
    $region25: #{conv1d_bn_relu.2} parent=5 // pred_check
      _
    $region26: #{conv1d_bn_relu.2} parent=5 // pred_check_branch
      %137 = sbr.rel (%p134) target = $region28
    $region27: #{conv1d_bn_relu.2} parent=5 // pred_region
      %s138 = ssub.s32 %s8, 1
      %s139 = smul.u32 2, %s18
      %p140 = scmp.lt.s32.totalorder %s17, 1
      %s141 = scalar_select %p140, %s17, 1
      %p142 = scmp.lt.s32.totalorder %s139, 1
      %s143 = scalar_select %p142, %s139, 1
      %s144 = smul.addr %s141, 2
      %s145 = sadd.s32 %s143, %s144
      %s146 = smul.addr %s145, 8
      %s147 = scalar_lea.vmem %s0, %s146
      %p148 = pneg %p48
      %p149 = pneg %p45
      %p150 = pneg %p69
      %p151 = pneg %p66
      %p152 = pneg %p97
      %p153 = pneg %p94
      %s154 = sadd.s32 %s17, %s18
      %p155 = scmp.lt.s32.totalorder %s154, 1
      %s156 = scalar_select %p155, %s154, 1
      %s157 = smul.addr %s156, 8
      %s158 = scalar_lea.vmem %s2, %s157
      %s159 = smul.u32 2, %s18
      %p160 = scmp.lt.s32.totalorder %s17, 1
      %s161 = scalar_select %p160, %s17, 1
      %p162 = scmp.lt.s32.totalorder %s159, 1
      %s163 = scalar_select %p162, %s159, 1
      %s164 = smul.addr %s161, 2
      %s165 = sadd.s32 %s163, %s164
      %s166 = smul.addr %s165, 8
      %s167 = scalar_lea.vmem %s0, %s166
      %s168 = smul.u32 2, %s18
      %s169 = sadd.s32 %s17, %s18
      %p170 = scmp.lt.s32.totalorder %s169, 1
      %s171 = scalar_select %p170, %s169, 1
      %s172 = smul.addr %s171, 8
      %s173 = scalar_lea.vmem %s2, %s172
      %s174 = sadd.s32 %s17, %s18
      %v175 = vld [vmem:[%s1] sm:$0xff]
      %v176 = vld [vmem:[%s167] sm:$0xff]
      %v177 = vld [vmem:[%s167 + $0x8] sm:$0xff]
      %vm178 = vcmask 130048
      %v180 = vsel %vm178, %v175, 0
      %v183 = vsel %vm178, %v176, 0
      %v186 = vsel %vm178, %v177, 0
      %188 = vmatprep.subr.mxu0 0.0
      %189 = vmatpush1.xpose.msra.mxu0 %v183
      %190 = vmatprep.subr.mxu0 0.0
      %191 = vmatpush1.xpose.msra.mxu0 %v186
      %192 = vmatprep.subr.mxu0 0.0
      %193 = vmatpush1.xpose.msra.mxu0 0.0
      %194 = vmatprep.subr.mxu0 0.0
      %195 = vmatpush1.xpose.msra.mxu0 0.0
      %196 = vmatprep.subr.mxu0 0.0
      %197 = vmatpush1.xpose.msra.mxu0 0.0
      %198 = vmatprep.subr.mxu0 0.0
      %199 = vmatpush1.xpose.msra.mxu0 0.0
      %200 = vmatprep.subr.mxu0 0.0
      %201 = vmatpush1.xpose.msra.mxu0 0.0
      %202 = vmatprep.subr.mxu0 0.0
      %203 = vmatpush1.xpose.msra.mxu0 0.0
      %204 = vmatprep.subr.mxu0 0.0
      %205 = vmatpush1.xpose.msra.mxu0 0.0
      %206 = vmatprep.subr.mxu0 0.0
      %207 = vmatpush1.xpose.msra.mxu0 0.0
      %208 = vmatprep.subr.mxu0 0.0
      %209 = vmatpush1.xpose.msra.mxu0 0.0
      %210 = vmatprep.subr.mxu0 0.0
      %211 = vmatpush1.xpose.msra.mxu0 0.0
      %212 = vmatprep.subr.mxu0 0.0
      %213 = vmatpush1.xpose.msra.mxu0 0.0
      %214 = vmatprep.subr.mxu0 0.0
      %215 = vmatpush1.xpose.msra.mxu0 0.0
      %216 = vmatprep.subr.mxu0 0.0
      %217 = vmatpush1.xpose.msra.mxu0 0.0
      %218 = vmatprep.subr.mxu0 0.0
      %219 = vmatpush1.xpose.msra.mxu0 0.0
      %220 = vmatprep.subr.mxu0 0.0
      %221 = vmatpush1.xpose.msra.mxu0 0.0
      %222 = vmatprep.subr.mxu0 0.0
      %223 = vmatpush1.xpose.msra.mxu0 0.0
      %224 = vmatprep.subr.mxu0 0.0
      %225 = vmatpush1.xpose.msra.mxu0 0.0
      %226 = vmatprep.subr.mxu0 0.0
      %227 = vmatpush1.xpose.msra.mxu0 0.0
      %228 = vmatprep.subr.mxu0 0.0
      %229 = vmatpush1.xpose.msra.mxu0 0.0
      %230 = vmatprep.subr.mxu0 0.0
      %231 = vmatpush1.xpose.msra.mxu0 0.0
      %232 = vmatprep.subr.mxu0 0.0
      %233 = vmatpush1.xpose.msra.mxu0 0.0
      %234 = vmatprep.subr.mxu0 0.0
      %235 = vmatpush1.xpose.msra.mxu0 0.0
      %236 = vmatprep.subr.mxu0 0.0
      %237 = vmatpush1.xpose.msra.mxu0 0.0
      %238 = vmatprep.subr.mxu0 0.0
      %239 = vmatpush1.xpose.msra.mxu0 0.0
      %240 = vmatprep.subr.mxu0 0.0
      %241 = vmatpush1.xpose.msra.mxu0 0.0
      %242 = vmatprep.subr.mxu0 0.0
      %243 = vmatpush1.xpose.msra.mxu0 0.0
      %244 = vmatprep.subr.mxu0 0.0
      %245 = vmatpush1.xpose.msra.mxu0 0.0
      %246 = vmatprep.subr.mxu0 0.0
      %247 = vmatpush1.xpose.msra.mxu0 0.0
      %248 = vmatprep.subr.mxu0 0.0
      %249 = vmatpush1.xpose.msra.mxu0 0.0
      %250 = vmatprep.subr.mxu0 0.0
      %251 = vmatpush1.xpose.msra.mxu0 0.0
      %252 = vmatprep.mubr.f32.mxu0 0.0
      %253 = vmatmul.mubr.f32.gmra.mrb[0].mxu0 %v180
      %v254 = vpop.f32.mrb[0].mxu0
      %v255 = vadd.f32 0.0, %v254
      %v256 = vpop.f32.mrb[0].mxu0
      %257 = vdwg.mxu0
      %v258 = vsel %vm178, %v255, 0.0
      %259 = vadd.xlane.f32.xlu0 %v258
      %v260 = vpop.xlane.xlu0 %259
      %vm261 = vcmask 7168
      %262 = vst.msk [vmem:[%s173] sm:$0xff] %vm261, %v260
      %v263 = vmul.f32 %v255, %v255
      %v264 = vsel %vm178, %v263, 0.0
      %265 = vadd.xlane.f32.xlu0 %v264
      %v266 = vpop.xlane.xlu0 %265
      %vm267 = vcmask 15368
      %268 = vst.msk [vmem:[%s173] sm:$0xff] %vm267, %v266
      %s269 = sadd.s32 %s17, %s18
      %p270 = scmp.lt.s32.totalorder %s269, 1
      %s271 = scalar_select %p270, %s269, 1
      %s272 = smul.addr %s271, 8
      %s273 = scalar_lea.vmem %s2, %s272
      // Predicated region
      $region29: #{conv1d_bn_relu.2} parent=27 // pred_check
        %p274 = pneg %p94
      $region30: #{conv1d_bn_relu.2} parent=27 // pred_check_branch
        %276 = sbr.rel (%p274) target = $region32
      $region31: #{conv1d_bn_relu.2} parent=27 // pred_region
        %s277 = sadd.s32 %s17, %s18
      $region32: #{conv1d_bn_relu.2} parent=27 // pred_fallthru
        _
    $region28: #{conv1d_bn_relu.2} parent=5 // pred_fallthru
      _
    %p278 = scmp.le.s32.totalorder 2, %s8
    // Predicated region
    $region33: #{conv1d_bn_relu.2} parent=5 // pred_check
      %p279 = pneg %p278
    $region34: #{conv1d_bn_relu.2} parent=5 // pred_check_branch
      %281 = sbr.rel (%p279) target = $region36
    $region35: #{conv1d_bn_relu.2} parent=5 // pred_region
      %s282 = ssub.s32 %s8, 2
      // Predicated region
      $region37: #{conv1d_bn_relu.2} parent=35 // pred_check
        %p283 = pneg %p100
      $region38: #{conv1d_bn_relu.2} parent=35 // pred_check_branch
        %285 = sbr.rel (%p283) target = $region40
      $region39: #{conv1d_bn_relu.2} parent=35 // pred_region
        %s286 = sadd.s32 %s19, %s20
        %p287 = scmp.lt.s32.totalorder %s286, 1
        %s288 = scalar_select %p287, %s286, 1
        %s289 = smul.addr %s288, 8
        %s290 = scalar_lea.vmem %s2, %s289
      $region40: #{conv1d_bn_relu.2} parent=35 // pred_fallthru
        _
    $region36: #{conv1d_bn_relu.2} parent=5 // pred_fallthru
      _
  $region6: #{conv1d_bn_relu.2} parent=0 // loop_footer
    %s12 = sadd.s32 1, %s8
  $region7: #{conv1d_bn_relu.2} parent=0 // loop_footer_branch
    %7 = sbr.rel target = $region3
  $region8: #{conv1d_bn_relu.2} parent=0 // loop_exit
    _

// kernel: conv1d_bn_relu.3
$region0: #{conv1d_bn_relu.3}
  #allocation0 [shape = 'u32[]', space=smem, size = 0x4, offset = 0x4, fixed_abs, tag = 'smem constant byte address 0x4 - core index']
  #allocation1 [shape = 'u32[144,128]{1,0:T(1,128)}', space=vmem, size = 0x12000, scoped, tag = 'internal scratch']
  %s0 = inlined_call_operand.vmem [shape: f32[2,16,16], index: 0, kind: input, shape index: {}]
  %s1 = inlined_call_operand.vmem [shape: f32[8,16], index: 1, kind: input, shape index: {}]
  %s2 = inlined_call_operand.vmem [shape: f32[8,1], index: 2, kind: input, shape index: {}]
  %s3 = inlined_call_operand.vmem [shape: f32[8,1], index: 3, kind: input, shape index: {}]
  %s4 = inlined_call_operand.hbm [shape: f32[2,8,16], index: 4, kind: output, shape index: {}]
  %s5 = sld [smem:[#allocation0]]
  $region49: #{conv1d_bn_relu.3} parent=0
    _
  %s7 = ssub.s32 1, %s5
  %s8 = scalar_select 0, %s7, %s5
  $region1: #{conv1d_bn_relu.3} parent=0
    #allocation2 [shape = 'u8[8192]{0}', space=vmem, size = 0x2000, scoped, tag = 'output window, operand 0']
    #allocation3 [shape = 's32[2]{0}', space=sflag, size = 0x8, scoped, tag = 'scoped memory for conv1d_bn_relu.3']
    %9 = vsyncpa [#allocation3], 0
    %s10 = scalar_lea.sflag [#allocation3], 1
    %11 = vsyncpa %s10, 0
    loop: start=0, step=1, limit=4
    $region2: #{conv1d_bn_relu.3} parent=1 // loop_pre_header
      _
    $region3: #{conv1d_bn_relu.3} parent=1 // loop_header
      %s13 = sphi 0, %s17
      %p14 = scmp.ge.s32.totalorder %s13, 4
      %s20 = sphi 0, %s32
      %s21 = sphi 0, %s28
      %s22 = sphi 0, %s20
      %s23 = sphi 0, %s21
      %s24 = sphi 0, %s22
      %s25 = sphi 0, %s23
      %s37 = sphi 0, %s39
      %s40 = sphi 0, %s37
      %s41 = sphi 0, %s40
      %s57 = sphi 0, %s41
      %s61 = sphi 0, %s61
      %s63 = sphi 0, %s61
      %s64 = sphi 0, %s63
      %s78 = sphi 0, %s64
      %s82 = sphi 0, %s82
      %s84 = sphi 0, %s82
      %s85 = sphi 0, %s84
      %s99 = sphi 0, %s85
      %s103 = sphi 0, %s103
      %s105 = sphi 0, %s103
      %s106 = sphi 0, %s105
      %s120 = sphi 0, %s106
      %s128 = sphi 0, %s130
      %s131 = sphi 0, %s128
      %s132 = sphi 0, %s131
      %s148 = sphi 0, %s132
    $region4: #{conv1d_bn_relu.3} parent=1 // loop_header_branch
      %16 = sbr.rel (%p14) target = $region8
    $region5: #{conv1d_bn_relu.3} parent=1 // loop_body
      %s18 = ssub.s32 %s13, 1
      %s19 = ssub.s32 %s13, 2
      %s26 = sadd.s32 1, %s21
      %p27 = scmp.ge.s32.totalorder %s26, 1
      %s28 = scalar_select %p27, 0, %s26
      %s29 = sadd.s32 1, %s20
      %s30 = scalar_select %p27, %s29, %s20
      %p31 = scmp.ge.s32.totalorder %s30, 2
      %s32 = scalar_select %p31, 0, %s30
      %s33 = ssub.s32 %s20, %s32
      %s34 = ssub.s32 %s21, %s28
      %s35 = sor.u32 %s33, %s34
      %p36 = scmp.eq.s32.totalorder %s35, 0
      %s38 = sadd.s32 %s37, 1
      %s39 = scalar_select %p36, %s37, %s38
      %p42 = pneg %p36
      %p43 = scmp.eq.s32.totalorder %s13, 1
      %p44 = por %p42, %p43
      %p45 = scmp.ne.s32.totalorder %s37, %s40
      %p46 = scmp.eq.s32.totalorder %s13, 0
      %p47 = por %p45, %p46
      %p48 = scmp.ne.s32.totalorder %s37, %s40
      %p49 = scmp.eq.s32.totalorder %s18, 1
      %p50 = por %p48, %p49
      %p51 = scmp.ne.s32.totalorder %s40, %s41
      %p52 = scmp.eq.s32.totalorder %s18, 0
      %p53 = por %p51, %p52
      %p54 = scmp.ne.s32.totalorder %s40, %s41
      %p55 = scmp.eq.s32.totalorder %s19, 1
      %p56 = por %p54, %p55
      %p58 = scmp.ne.s32.totalorder %s41, %s57
      %p59 = scmp.eq.s32.totalorder %s19, 0
      %p60 = por %p58, %p59
      %s62 = sadd.s32 %s61, 1
      %p65 = scmp.eq.s32.totalorder %s13, 1
      %p66 = scmp.ne.s32.totalorder %s61, %s63
      %p67 = scmp.eq.s32.totalorder %s13, 0
      %p68 = por %p66, %p67
      %p69 = scmp.ne.s32.totalorder %s61, %s63
      %p70 = scmp.eq.s32.totalorder %s18, 1
      %p71 = por %p69, %p70
      %p72 = scmp.ne.s32.totalorder %s63, %s64
      %p73 = scmp.eq.s32.totalorder %s18, 0
      %p74 = por %p72, %p73
      %p75 = scmp.ne.s32.totalorder %s63, %s64
      %p76 = scmp.eq.s32.totalorder %s19, 1
      %p77 = por %p75, %p76
      %p79 = scmp.ne.s32.totalorder %s64, %s78
      %p80 = scmp.eq.s32.totalorder %s19, 0
      %p81 = por %p79, %p80
      %s83 = sadd.s32 %s82, 1
      %p86 = scmp.eq.s32.totalorder %s13, 1
      %p87 = scmp.ne.s32.totalorder %s82, %s84
      %p88 = scmp.eq.s32.totalorder %s13, 0
      %p89 = por %p87, %p88
      %p90 = scmp.ne.s32.totalorder %s82, %s84
      %p91 = scmp.eq.s32.totalorder %s18, 1
      %p92 = por %p90, %p91
      %p93 = scmp.ne.s32.totalorder %s84, %s85
      %p94 = scmp.eq.s32.totalorder %s18, 0
      %p95 = por %p93, %p94
      %p96 = scmp.ne.s32.totalorder %s84, %s85
      %p97 = scmp.eq.s32.totalorder %s19, 1
      %p98 = por %p96, %p97
      %p100 = scmp.ne.s32.totalorder %s85, %s99
      %p101 = scmp.eq.s32.totalorder %s19, 0
      %p102 = por %p100, %p101
      %s104 = sadd.s32 %s103, 1
      %p107 = scmp.eq.s32.totalorder %s13, 1
      %p108 = scmp.ne.s32.totalorder %s103, %s105
      %p109 = scmp.eq.s32.totalorder %s13, 0
      %p110 = por %p108, %p109
      %p111 = scmp.ne.s32.totalorder %s103, %s105
      %p112 = scmp.eq.s32.totalorder %s18, 1
      %p113 = por %p111, %p112
      %p114 = scmp.ne.s32.totalorder %s105, %s106
      %p115 = scmp.eq.s32.totalorder %s18, 0
      %p116 = por %p114, %p115
      %p117 = scmp.ne.s32.totalorder %s105, %s106
      %p118 = scmp.eq.s32.totalorder %s19, 1
      %p119 = por %p117, %p118
      %p121 = scmp.ne.s32.totalorder %s106, %s120
      %p122 = scmp.eq.s32.totalorder %s19, 0
      %p123 = por %p121, %p122
      %s124 = ssub.s32 %s20, %s32
      %s125 = ssub.s32 %s21, %s28
      %s126 = sor.u32 %s124, %s125
      %p127 = scmp.eq.s32.totalorder %s126, 0
      %s129 = sadd.s32 %s128, 1
      %s130 = scalar_select %p127, %s128, %s129
      %p133 = pneg %p127
      %p134 = scmp.eq.s32.totalorder %s13, 1
      %p135 = por %p133, %p134
      %p136 = scmp.ne.s32.totalorder %s128, %s131
      %p137 = scmp.eq.s32.totalorder %s13, 0
      %p138 = por %p136, %p137
      %p139 = scmp.ne.s32.totalorder %s128, %s131
      %p140 = scmp.eq.s32.totalorder %s18, 1
      %p141 = por %p139, %p140
      %p142 = scmp.ne.s32.totalorder %s131, %s132
      %p143 = scmp.eq.s32.totalorder %s18, 0
      %p144 = por %p142, %p143
      %p145 = scmp.ne.s32.totalorder %s131, %s132
      %p146 = scmp.eq.s32.totalorder %s19, 1
      %p147 = por %p145, %p146
      %p149 = scmp.ne.s32.totalorder %s132, %s148
      %p150 = scmp.eq.s32.totalorder %s19, 0
      %p151 = por %p149, %p150
      %p152 = scmp.le.s32.totalorder 1, %s13
      %p153 = scmp.lt.s32.totalorder %s13, 3
      %p154 = pnand %p152, %p153
      %p155 = pneg %p154
      // Predicated region
      $region9: #{conv1d_bn_relu.3} parent=5 // pred_check
        _
      $region10: #{conv1d_bn_relu.3} parent=5 // pred_check_branch
        %157 = sbr.rel (%p154) target = $region12
      $region11: #{conv1d_bn_relu.3} parent=5 // pred_region
        %s158 = ssub.s32 %s13, 1
        // Predicated region
        $region13: #{conv1d_bn_relu.3} parent=11 // pred_check
          %p159 = pneg %p74
        $region14: #{conv1d_bn_relu.3} parent=11 // pred_check_branch
          %161 = sbr.rel (%p159) target = $region16
        $region15: #{conv1d_bn_relu.3} parent=11 // pred_region
          _
        $region16: #{conv1d_bn_relu.3} parent=11 // pred_fallthru
          _
        // Predicated region
        $region17: #{conv1d_bn_relu.3} parent=11 // pred_check
          %p162 = pneg %p95
        $region18: #{conv1d_bn_relu.3} parent=11 // pred_check_branch
          %164 = sbr.rel (%p162) target = $region20
        $region19: #{conv1d_bn_relu.3} parent=11 // pred_region
          _
        $region20: #{conv1d_bn_relu.3} parent=11 // pred_fallthru
          _
        // Predicated region
        $region21: #{conv1d_bn_relu.3} parent=11 // pred_check
          %p165 = pneg %p116
        $region22: #{conv1d_bn_relu.3} parent=11 // pred_check_branch
          %167 = sbr.rel (%p165) target = $region24
        $region23: #{conv1d_bn_relu.3} parent=11 // pred_region
          _
        $region24: #{conv1d_bn_relu.3} parent=11 // pred_fallthru
          _
      $region12: #{conv1d_bn_relu.3} parent=5 // pred_fallthru
        _
      %p168 = scmp.lt.s32.totalorder %s13, 2
      // Predicated region
      $region25: #{conv1d_bn_relu.3} parent=5 // pred_check
        %p169 = pneg %p168
      $region26: #{conv1d_bn_relu.3} parent=5 // pred_check_branch
        %171 = sbr.rel (%p169) target = $region28
      $region27: #{conv1d_bn_relu.3} parent=5 // pred_region
        // Predicated region
        $region29: #{conv1d_bn_relu.3} parent=27 // pred_check
          %p172 = pneg %p47
        $region30: #{conv1d_bn_relu.3} parent=27 // pred_check_branch
          %174 = sbr.rel (%p172) target = $region32
        $region31: #{conv1d_bn_relu.3} parent=27 // pred_region
          %s175 = smul.u32 2, %s21
          %p176 = scmp.lt.s32.totalorder %s20, 1
          %s177 = scalar_select %p176, %s20, 1
          %p178 = scmp.lt.s32.totalorder %s175, 1
          %s179 = scalar_select %p178, %s175, 1
          %s180 = smul.addr %s177, 2
          %s181 = sadd.s32 %s179, %s180
          %s182 = smul.addr %s181, 8
          %s183 = scalar_lea.vmem %s0, %s182
          %s184 = smul.u32 2, %s21
        $region32: #{conv1d_bn_relu.3} parent=27 // pred_fallthru
          _
      $region28: #{conv1d_bn_relu.3} parent=5 // pred_fallthru
        _
      %p185 = scmp.le.s32.totalorder 1, %s13
      %p186 = scmp.lt.s32.totalorder %s13, 3
      %p187 = pnand %p185, %p186
      %p188 = pneg %p187
      // Predicated region
      $region33: #{conv1d_bn_relu.3} parent=5 // pred_check
        _
      $region34: #{conv1d_bn_relu.3} parent=5 // pred_check_branch
        %190 = sbr.rel (%p187) target = $region36
      $region35: #{conv1d_bn_relu.3} parent=5 // pred_region
        %s191 = ssub.s32 %s13, 1
        %s192 = smul.u32 2, %s23
        %p193 = scmp.lt.s32.totalorder %s22, 1
        %s194 = scalar_select %p193, %s22, 1
        %p195 = scmp.lt.s32.totalorder %s192, 1
        %s196 = scalar_select %p195, %s192, 1
        %s197 = smul.addr %s194, 2
        %s198 = sadd.s32 %s196, %s197
        %s199 = smul.addr %s198, 8
        %s200 = scalar_lea.vmem %s0, %s199
        %p201 = pneg %p53
        %p202 = pneg %p50
        %p203 = pneg %p74
        %p204 = pneg %p71
        %p205 = pneg %p95
        %p206 = pneg %p92
        %p207 = pneg %p116
        %p208 = pneg %p113
        %p209 = pneg %p144
        %p210 = pneg %p141
        %s211 = sand.u32 %s131, 1
        %s212 = scalar_lea.sflag [#allocation3], %s211
        %s213 = sand.u32 %s131, 1
        %s214 = smul.addr %s213, 8
        %s215 = scalar_lea.vmem [#allocation2], %s214
        %s216 = smul.u32 2, %s23
        %p217 = scmp.lt.s32.totalorder %s22, 1
        %s218 = scalar_select %p217, %s22, 1
        %p219 = scmp.lt.s32.totalorder %s216, 1
        %s220 = scalar_select %p219, %s216, 1
        %s221 = smul.addr %s218, 2
        %s222 = sadd.s32 %s220, %s221
        %s223 = smul.addr %s222, 8
        %s224 = scalar_lea.vmem %s0, %s223
        %s225 = smul.u32 2, %s23
        %v226 = vld [vmem:[%s1] sm:$0xff]
        %v227 = vld [vmem:[%s224] sm:$0xff]
        %v228 = vld [vmem:[%s224 + $0x8] sm:$0xff]
        %vm229 = vcmask 130048
        %v231 = vsel %vm229, %v226, 0
        %v234 = vsel %vm229, %v227, 0
        %v237 = vsel %vm229, %v228, 0
        %239 = vmatprep.subr.mxu0 0.0
        %240 = vmatpush1.xpose.msra.mxu0 %v234
        %241 = vmatprep.subr.mxu0 0.0
        %242 = vmatpush1.xpose.msra.mxu0 %v237
        %243 = vmatprep.subr.mxu0 0.0
        %244 = vmatpush1.xpose.msra.mxu0 0.0
        %245 = vmatprep.subr.mxu0 0.0
        %246 = vmatpush1.xpose.msra.mxu0 0.0
        %247 = vmatprep.subr.mxu0 0.0
        %248 = vmatpush1.xpose.msra.mxu0 0.0
        %249 = vmatprep.subr.mxu0 0.0
        %250 = vmatpush1.xpose.msra.mxu0 0.0
        %251 = vmatprep.subr.mxu0 0.0
        %252 = vmatpush1.xpose.msra.mxu0 0.0
        %253 = vmatprep.subr.mxu0 0.0
        %254 = vmatpush1.xpose.msra.mxu0 0.0
        %255 = vmatprep.subr.mxu0 0.0
        %256 = vmatpush1.xpose.msra.mxu0 0.0
        %257 = vmatprep.subr.mxu0 0.0
        %258 = vmatpush1.xpose.msra.mxu0 0.0
        %259 = vmatprep.subr.mxu0 0.0
        %260 = vmatpush1.xpose.msra.mxu0 0.0
        %261 = vmatprep.subr.mxu0 0.0
        %262 = vmatpush1.xpose.msra.mxu0 0.0
        %263 = vmatprep.subr.mxu0 0.0
        %264 = vmatpush1.xpose.msra.mxu0 0.0
        %265 = vmatprep.subr.mxu0 0.0
        %266 = vmatpush1.xpose.msra.mxu0 0.0
        %267 = vmatprep.subr.mxu0 0.0
        %268 = vmatpush1.xpose.msra.mxu0 0.0
        %269 = vmatprep.subr.mxu0 0.0
        %270 = vmatpush1.xpose.msra.mxu0 0.0
        %271 = vmatprep.subr.mxu0 0.0
        %272 = vmatpush1.xpose.msra.mxu0 0.0
        %273 = vmatprep.subr.mxu0 0.0
        %274 = vmatpush1.xpose.msra.mxu0 0.0
        %275 = vmatprep.subr.mxu0 0.0
        %276 = vmatpush1.xpose.msra.mxu0 0.0
        %277 = vmatprep.subr.mxu0 0.0
        %278 = vmatpush1.xpose.msra.mxu0 0.0
        %279 = vmatprep.subr.mxu0 0.0
        %280 = vmatpush1.xpose.msra.mxu0 0.0
        %281 = vmatprep.subr.mxu0 0.0
        %282 = vmatpush1.xpose.msra.mxu0 0.0
        %283 = vmatprep.subr.mxu0 0.0
        %284 = vmatpush1.xpose.msra.mxu0 0.0
        %285 = vmatprep.subr.mxu0 0.0
        %286 = vmatpush1.xpose.msra.mxu0 0.0
        %287 = vmatprep.subr.mxu0 0.0
        %288 = vmatpush1.xpose.msra.mxu0 0.0
        %289 = vmatprep.subr.mxu0 0.0
        %290 = vmatpush1.xpose.msra.mxu0 0.0
        %291 = vmatprep.subr.mxu0 0.0
        %292 = vmatpush1.xpose.msra.mxu0 0.0
        %293 = vmatprep.subr.mxu0 0.0
        %294 = vmatpush1.xpose.msra.mxu0 0.0
        %295 = vmatprep.subr.mxu0 0.0
        %296 = vmatpush1.xpose.msra.mxu0 0.0
        %297 = vmatprep.subr.mxu0 0.0
        %298 = vmatpush1.xpose.msra.mxu0 0.0
        %299 = vmatprep.subr.mxu0 0.0
        %300 = vmatpush1.xpose.msra.mxu0 0.0
        %301 = vmatprep.subr.mxu0 0.0
        %302 = vmatpush1.xpose.msra.mxu0 0.0
        %303 = vmatprep.mubr.f32.mxu0 0.0
        %304 = vmatmul.mubr.f32.gmra.mrb[0].mxu0 %v231
        %v305 = vpop.f32.mrb[0].mxu0
        %v306 = vadd.f32 0.0, %v305
        %v307 = vpop.f32.mrb[0].mxu0
        %308 = vdwg.mxu0
        %v309 = vld [vmem:[%s2] sm:$0xff]
        %311 = vset.pattern.permute.xlu0 0
        %312 = vperm.xlu0 %311, %v309
        %v313 = vpop.permute.xlu0 %312
        %v315 = vmul.f32 %v306, %v313
        %v316 = vld [vmem:[%s3] sm:$0xff]
        %318 = vset.pattern.permute.xlu0 0
        %319 = vperm.xlu0 %318, %v316
        %v320 = vpop.permute.xlu0 %319
        %v322 = vadd.f32 %v315, %v320
        %v323 = vmax.f32 %v322, 0.0
        %324 = vst.msk [vmem:[%s215] sm:$0xff] %vm229, %v323
        %s325 = sand.u32 %s131, 1
        %s326 = scalar_lea.sflag [#allocation3], %s325
        %s327 = sand.u32 %s131, 1
        %s328 = smul.addr %s327, 8
        %s329 = scalar_lea.vmem [#allocation2], %s328
        // Predicated region
        $region37: #{conv1d_bn_relu.3} parent=35 // pred_check
          %p330 = pneg %p141
        $region38: #{conv1d_bn_relu.3} parent=35 // pred_check_branch
          %332 = sbr.rel (%p330) target = $region40
        $region39: #{conv1d_bn_relu.3} parent=35 // pred_region
          %s334 = ssub.s32 128, 128
          %335 = vsyncadd %s326, %s334
          %s336 = sadd.s32 %s23, %s22
          %s337 = smul.addr %s336, 128
          %s338 = scalar_lea.hbm %s4, %s337
          %s340 = sshll.u32 %s329, 4
          %s341 = int_to_ptr.vmem [resolvable:$true] %s340
          %343 = dma.vmem_to_hbm [thread:$0]  %s341, 128, %s338, %s326
        $region40: #{conv1d_bn_relu.3} parent=35 // pred_fallthru
          _
      $region36: #{conv1d_bn_relu.3} parent=5 // pred_fallthru
        _
      %p344 = scmp.le.s32.totalorder 2, %s13
      // Predicated region
      $region41: #{conv1d_bn_relu.3} parent=5 // pred_check
        %p345 = pneg %p344
      $region42: #{conv1d_bn_relu.3} parent=5 // pred_check_branch
        %347 = sbr.rel (%p345) target = $region44
      $region43: #{conv1d_bn_relu.3} parent=5 // pred_region
        %s348 = ssub.s32 %s13, 2
        // Predicated region
        $region45: #{conv1d_bn_relu.3} parent=43 // pred_check
          %p349 = pneg %p147
        $region46: #{conv1d_bn_relu.3} parent=43 // pred_check_branch
          %351 = sbr.rel (%p349) target = $region48
        $region47: #{conv1d_bn_relu.3} parent=43 // pred_region
          %s352 = sand.u32 %s132, 1
          %s353 = scalar_lea.sflag [#allocation3], %s352
          %s354 = sand.u32 %s132, 1
          %s355 = smul.addr %s354, 8
          %s356 = scalar_lea.vmem [#allocation2], %s355
          %357 = dma.done %s353, 128
        $region48: #{conv1d_bn_relu.3} parent=43 // pred_fallthru
          _
      $region44: #{conv1d_bn_relu.3} parent=5 // pred_fallthru
        _
    $region6: #{conv1d_bn_relu.3} parent=1 // loop_footer
      %s17 = sadd.s32 1, %s13
    $region7: #{conv1d_bn_relu.3} parent=1 // loop_footer_branch
      %12 = sbr.rel target = $region3
    $region8: #{conv1d_bn_relu.3} parent=1 // loop_exit
      _
    %358 = vsyncpa [#allocation3], 1
    %s359 = scalar_lea.sflag [#allocation3], 1
    %360 = vsyncpa %s359, 1

</llo_original>
